<compile_context>
chip_gen: v7x
topology: tpu7x:2x2x1
jax: 0.10.0
libtpu: 0.0.40
codegen_flags: <defaults>
</compile_context>

<pallas_src>
import functools

import jax
import jax.numpy as jnp
from jax.experimental import pallas as pl
from jax.experimental.pallas import tpu as pltpu

EPS = 1e-5
_FOOTPRINT_BUDGET = 12 * 1024 * 1024   # target double-buffered in+out bytes
_VMEM_LIMIT = 32 * 1024 * 1024         # explicit scoped-VMEM limit (all gens)


def _round_up(x, m):
    return (x + m - 1) // m * m


def _c_tile_candidates(c):
    if c % 8 != 0:
        return [c]                       # full channel extent (allowed by block rule)
    return [t for t in range(c, 7, -8) if c % t == 0]


# ---------------------------------------------------------------------------
# Fused single-pass kernel: stats + normalize for one channel tile.
#   a = (scale * gamma) * inv_std ; b = (scale * beta + bias) - a * mean
# ---------------------------------------------------------------------------
def _fused_kernel(x_ref, sg_ref, sb_ref, o_ref, *, inv_count):
    x = x_ref[...].astype(jnp.float32)                        # (N, ct, HWp)
    mean = jnp.sum(x, axis=(0, 2), keepdims=True) * inv_count  # (1, ct, 1)
    ex2 = jnp.sum(x * x, axis=(0, 2), keepdims=True) * inv_count
    var = jnp.maximum(ex2 - mean * mean, 0.0)
    inv_std = jax.lax.rsqrt(var + EPS)
    a = sg_ref[...] * inv_std                                  # (N, ct, 1)
    b = sb_ref[...] - a * mean                                 # (N, ct, 1)
    o_ref[...] = (x * a + b).astype(o_ref.dtype)


# ---------------------------------------------------------------------------
# Two-pass fallback, pass 1: per-channel sum and sum-of-squares.
# grid = (c_tiles, n_tiles, hw_tiles); (n, hw) are the reduction axes (last).
# ---------------------------------------------------------------------------
def _stats_kernel(x_ref, sum_ref, sumsq_ref):
    @pl.when((pl.program_id(1) == 0) & (pl.program_id(2) == 0))
    def _init():
        sum_ref[...] = jnp.zeros_like(sum_ref)
        sumsq_ref[...] = jnp.zeros_like(sumsq_ref)

    x = x_ref[...].astype(jnp.float32)                         # (nt, ct, hwt)
    sum_ref[...] += jnp.sum(x, axis=(0, 2), keepdims=True)     # (1, ct, 1)
    sumsq_ref[...] += jnp.sum(x * x, axis=(0, 2), keepdims=True)


# ---------------------------------------------------------------------------
# Two-pass fallback, pass 2: pure fused multiply-add, all grid axes parallel.
# ---------------------------------------------------------------------------
def _affine_kernel(x_ref, a_ref, b_ref, o_ref):
    x = x_ref[...].astype(jnp.float32)
    o_ref[...] = (x * a_ref[...] + b_ref[...]).astype(o_ref.dtype)


# ---------------------------------------------------------------------------
# Wrapper
# ---------------------------------------------------------------------------
def conditional_batch_norm(x_nchw, latent, w_lin, gamma, beta, *,
                           hw_tile=None, c_tile=None, n_tile=None,
                           force_two_pass=False):
    """Training-mode conditional batch norm.

    x_nchw: (N, C, H, W); latent: (N, L); w_lin: (2C, L) = nn.Linear weight
    (no bias); gamma/beta: (C,) BatchNorm2d affine parameters.
    """
    n, c, h, w = x_nchw.shape
    hw = h * w
    out_dtype = x_nchw.dtype
    itemsize = jnp.dtype(out_dtype).itemsize

    # ---- tiny latent projection + affine fold (plain JAX, (N, C) math) -----
    sb = latent.astype(jnp.float32) @ w_lin.astype(jnp.float32).T   # (N, 2C)
    scale = sb[:, :c]
    bias = sb[:, c:]
    gamma_f = gamma.astype(jnp.float32)[None, :]
    beta_f = beta.astype(jnp.float32)[None, :]
    sg = (scale * gamma_f)[..., None]                 # (N, C, 1): scale*gamma
    sb0 = (scale * beta_f + bias)[..., None]          # (N, C, 1): scale*beta+bias

    # ---- tile picking (bytes-based budget) ---------------------------------
    c_cands = _c_tile_candidates(c)
    if c_tile is None:
        cap = 64
        if c >= 16 and c % 8 == 0:
            cap = min(cap, c // 2)     # keep >= 2 channel tiles for megacore
        c_tile = next((t for t in c_cands if t <= cap), c_cands[-1])
    assert c % c_tile == 0

    if n_tile is None:
        n_tile = min(n, 8)
        while n % n_tile != 0:
            n_tile -= 1
    assert n % n_tile == 0

    hw128 = _round_up(hw, 128)
    if hw_tile is None:
        per_buf = _FOOTPRINT_BUDGET // 4          # in + out, double-buffered
        lane_cap = per_buf // max(1, n_tile * c_tile * itemsize)
        lane_cap = max(128, (lane_cap // 128) * 128)
        hw_tile = min(hw128, lane_cap)
    hw_tile = max(128, (hw_tile // 128) * 128)    # lane-dense tiles
    hw_pad = _round_up(hw, hw_tile)

    # ---- pad spatial extent to lane-dense multiple (zeros) -----------------
    x3 = x_nchw.reshape(n, c, hw)
    if hw_pad != hw:
        x3 = jnp.pad(x3, ((0, 0), (0, 0), (0, hw_pad - hw)))
    inv_count = 1.0 / float(n * hw)               # true count; padding is zero

    # ---- fused single-pass path when the channel slab fits the budget ------
    c_tile_fused = None
    if not force_two_pass:
        for t in c_cands:
            if 4 * n * t * hw_pad * itemsize <= _FOOTPRINT_BUDGET:
                c_tile_fused = t
                break

    if c_tile_fused is not None:
        grid = (c // c_tile_fused,)
        out3 = pl.pallas_call(
            functools.partial(_fused_kernel, inv_count=inv_count),
            out_shape=jax.ShapeDtypeStruct((n, c, hw_pad), out_dtype),
            grid_spec=pltpu.PrefetchScalarGridSpec(
                num_scalar_prefetch=0,
                grid=grid,
                in_specs=[
                    pl.BlockSpec((n, c_tile_fused, hw_pad),
                                 lambda ci: (0, ci, 0)),                  # x
                    pl.BlockSpec((n, c_tile_fused, 1), lambda ci: (0, ci, 0)),
                    pl.BlockSpec((n, c_tile_fused, 1), lambda ci: (0, ci, 0)),
                ],
                out_specs=pl.BlockSpec((n, c_tile_fused, hw_pad),
                                       lambda ci: (0, ci, 0)),
            ),
            compiler_params=pltpu.CompilerParams(
                dimension_semantics=("parallel",),
                vmem_limit_bytes=_VMEM_LIMIT),
            cost_estimate=pl.CostEstimate(
                flops=int(6 * n * c * hw_pad),
                bytes_accessed=int(2 * n * c * hw_pad * itemsize),
                transcendentals=int(c)),
        )(x3, sg, sb0)
    else:
        # ---- pass 1: per-channel sum / sumsq -------------------------------
        grid1 = (c // c_tile, n // n_tile, hw_pad // hw_tile)
        ssum, ssq = pl.pallas_call(
            _stats_kernel,
            out_shape=(jax.ShapeDtypeStruct((1, c, 1), jnp.float32),
                       jax.ShapeDtypeStruct((1, c, 1), jnp.float32)),
            grid_spec=pltpu.PrefetchScalarGridSpec(
                num_scalar_prefetch=0,
                grid=grid1,
                in_specs=[pl.BlockSpec((n_tile, c_tile, hw_tile),
                                       lambda ci, ni, ti: (ni, ci, ti))],
                out_specs=[pl.BlockSpec((1, c_tile, 1),
                                        lambda ci, ni, ti: (0, ci, 0)),
                           pl.BlockSpec((1, c_tile, 1),
                                        lambda ci, ni, ti: (0, ci, 0))],
            ),
            compiler_params=pltpu.CompilerParams(
                dimension_semantics=("parallel", "arbitrary", "arbitrary"),
                vmem_limit_bytes=_VMEM_LIMIT),
            cost_estimate=pl.CostEstimate(
                flops=int(3 * n * c * hw_pad),
                bytes_accessed=int(n * c * hw_pad * itemsize),
                transcendentals=0),
        )(x3)

        # ---- tiny per-(n, c) coefficient fold in plain JAX ------------------
        mean = ssum.reshape(1, c) * inv_count
        var = jnp.maximum(ssq.reshape(1, c) * inv_count - mean * mean, 0.0)
        inv_std = jax.lax.rsqrt(var + EPS)
        a = sg[..., 0] * inv_std                       # (N, C)
        b = sb0[..., 0] - a * mean                     # (N, C)
        a3 = a[..., None]
        b3 = b[..., None]

        # ---- pass 2: pure FMA, all axes parallel ----------------------------
        grid2 = (n // n_tile, c // c_tile, hw_pad // hw_tile)
        out3 = pl.pallas_call(
            _affine_kernel,
            out_shape=jax.ShapeDtypeStruct((n, c, hw_pad), out_dtype),
            grid_spec=pltpu.PrefetchScalarGridSpec(
                num_scalar_prefetch=0,
                grid=grid2,
                in_specs=[
                    pl.BlockSpec((n_tile, c_tile, hw_tile),
                                 lambda ni, ci, ti: (ni, ci, ti)),          # x
                    pl.BlockSpec((n_tile, c_tile, 1),
                                 lambda ni, ci, ti: (ni, ci, 0)),           # a
                    pl.BlockSpec((n_tile, c_tile, 1),
                                 lambda ni, ci, ti: (ni, ci, 0)),           # b
                ],
                out_specs=pl.BlockSpec((n_tile, c_tile, hw_tile),
                                       lambda ni, ci, ti: (ni, ci, ti)),
            ),
            compiler_params=pltpu.CompilerParams(
                dimension_semantics=("parallel", "parallel", "parallel"),
                vmem_limit_bytes=_VMEM_LIMIT),
            cost_estimate=pl.CostEstimate(
                flops=int(2 * n * c * hw_pad),
                bytes_accessed=int(2 * n * c * hw_pad * itemsize),
                transcendentals=0),
        )(x3, a3, b3)

    if hw_pad != hw:
        out3 = out3[:, :, :hw]
    return out3.reshape(n, c, h, w)


# ---------------------------------------------------------------------------
# Pure-JAX reference mirroring the PyTorch forward (training-mode BatchNorm2d).
# ---------------------------------------------------------------------------
def reference(x, latent, w_lin, gamma, beta):
    mean = jnp.mean(x, axis=(0, 2, 3), keepdims=True)
    var = jnp.mean((x - mean) ** 2, axis=(0, 2, 3), keepdims=True)
    bn = (x - mean) / jnp.sqrt(var + EPS)
    bn = bn * gamma[None, :, None, None] + beta[None, :, None, None]
    sb = latent @ w_lin.T
    c = x.shape[1]
    scale = sb[:, :c][:, :, None, None]
    bias = sb[:, c:][:, :, None, None]
    return scale * bn + bias


if __name__ == "__main__":
    N, C, H, W, L = 2, 4, 16, 16, 8

    key = jax.random.PRNGKey(0)
    kx, kz, kw, kg, kb = jax.random.split(key, 5)
    x = jax.random.normal(kx, (N, C, H, W), jnp.float32)
    latent = jax.random.normal(kz, (N, L), jnp.float32)
    # nn.Linear(L, 2*C, bias=False).weight -> (2C, L)
    w_lin = jax.random.normal(kw, (2 * C, L), jnp.float32) * (1.0 / jnp.sqrt(L))
    gamma = 1.0 + 0.1 * jax.random.normal(kg, (C,), jnp.float32)
    beta = 0.1 * jax.random.normal(kb, (C,), jnp.float32)

    ref = reference(x, latent, w_lin, gamma, beta)

    # Default: fused single-pass path (slab easily fits the VMEM budget).
    out_fused = jax.block_until_ready(
        conditional_batch_norm(x, latent, w_lin, gamma, beta))
    assert out_fused.shape == (N, C, H, W)
    err = jnp.max(jnp.abs(out_fused - ref))
    assert err < 5e-4, err

    # Forced two-pass fallback with multi-tile spatial accumulation.
    out_2p = jax.block_until_ready(
        conditional_batch_norm(x, latent, w_lin, gamma, beta,
                               force_two_pass=True, hw_tile=128))
    err = jnp.max(jnp.abs(out_2p - ref))
    assert err < 5e-4, err

    # Non-128-multiple spatial extent (14x14 -> HW=196): lane-padding path.
    xp = jax.random.normal(kx, (N, C, 14, 14), jnp.float32)
    refp = reference(xp, latent, w_lin, gamma, beta)
    outp = jax.block_until_ready(
        conditional_batch_norm(xp, latent, w_lin, gamma, beta))
    err = jnp.max(jnp.abs(outp - refp))
    assert err < 5e-4, err

    print("KERNEL_OK")
</pallas_src>

<mosaic_0001>
module attributes {stable_mosaic.version = 11 : i64} {
  func.func @_fused_kernel(%arg0: i32, %arg1: memref<2x4x256xf32, #tpu.memory_space<vmem>>, %arg2: memref<2x4x1xf32, #tpu.memory_space<vmem>>, %arg3: memref<2x4x1xf32, #tpu.memory_space<vmem>>, %arg4: memref<2x4x256xf32, #tpu.memory_space<vmem>>) attributes {dimension_semantics = [#tpu.dimension_semantics<parallel>], iteration_bounds = array<i64: 1>, scalar_prefetch = 0 : i64, scratch_operands = 0 : i64, tpu.core_type = #tpu.core_type<tc>, window_params = [{transform_indices = @transform_0, window_bounds = array<i64: 2, 4, 256>}, {transform_indices = @transform_1, window_bounds = array<i64: 2, 4, 1>}, {transform_indices = @transform_2, window_bounds = array<i64: 2, 4, 1>}, {transform_indices = @transform_3, window_bounds = array<i64: 2, 4, 256>}]} {
    %c0 = arith.constant 0 : index
    %c0_0 = arith.constant 0 : index
    %c0_1 = arith.constant 0 : index
    %0 = vector.load %arg1[%c0, %c0_0, %c0_1] : memref<2x4x256xf32, #tpu.memory_space<vmem>>, vector<2x4x256xf32>
    %cst = arith.constant dense<0.000000e+00> : vector<4xf32>
    %1 = vector.multi_reduction <add>, %0, %cst [0, 2] : vector<2x4x256xf32> to vector<4xf32>
    %2 = vector.shape_cast %1 : vector<4xf32> to vector<1x4x1xf32>
    %cst_2 = arith.constant 0.001953125 : f32
    %3 = vector.broadcast %cst_2 : f32 to vector<1x4x1xf32>
    %4 = arith.mulf %2, %3 : vector<1x4x1xf32>
    %5 = arith.mulf %0, %0 : vector<2x4x256xf32>
    %cst_3 = arith.constant dense<0.000000e+00> : vector<4xf32>
    %6 = vector.multi_reduction <add>, %5, %cst_3 [0, 2] : vector<2x4x256xf32> to vector<4xf32>
    %7 = vector.shape_cast %6 : vector<4xf32> to vector<1x4x1xf32>
    %cst_4 = arith.constant 0.001953125 : f32
    %8 = vector.broadcast %cst_4 : f32 to vector<1x4x1xf32>
    %9 = arith.mulf %7, %8 : vector<1x4x1xf32>
    %10 = arith.mulf %4, %4 : vector<1x4x1xf32>
    %11 = arith.subf %9, %10 : vector<1x4x1xf32>
    %cst_5 = arith.constant 0.000000e+00 : f32
    %12 = vector.broadcast %cst_5 : f32 to vector<1x4x1xf32>
    %13 = arith.maximumf %11, %12 : vector<1x4x1xf32>
    %cst_6 = arith.constant 9.99999974E-6 : f32
    %14 = vector.broadcast %cst_6 : f32 to vector<1x4x1xf32>
    %15 = arith.addf %13, %14 : vector<1x4x1xf32>
    %16 = math.rsqrt %15 : vector<1x4x1xf32>
    %c0_7 = arith.constant 0 : index
    %c0_8 = arith.constant 0 : index
    %c0_9 = arith.constant 0 : index
    %17 = vector.load %arg2[%c0_7, %c0_8, %c0_9] : memref<2x4x1xf32, #tpu.memory_space<vmem>>, vector<2x4x1xf32>
    %18 = vector.broadcast %16 : vector<1x4x1xf32> to vector<2x4x1xf32>
    %19 = arith.mulf %17, %18 : vector<2x4x1xf32>
    %c0_10 = arith.constant 0 : index
    %c0_11 = arith.constant 0 : index
    %c0_12 = arith.constant 0 : index
    %20 = vector.load %arg3[%c0_10, %c0_11, %c0_12] : memref<2x4x1xf32, #tpu.memory_space<vmem>>, vector<2x4x1xf32>
    %21 = vector.broadcast %4 : vector<1x4x1xf32> to vector<2x4x1xf32>
    %22 = arith.mulf %19, %21 : vector<2x4x1xf32>
    %23 = arith.subf %20, %22 : vector<2x4x1xf32>
    %24 = vector.broadcast %19 : vector<2x4x1xf32> to vector<2x4x256xf32>
    %25 = arith.mulf %0, %24 : vector<2x4x256xf32>
    %26 = vector.broadcast %23 : vector<2x4x1xf32> to vector<2x4x256xf32>
    %27 = arith.addf %25, %26 : vector<2x4x256xf32>
    %c0_13 = arith.constant 0 : index
    %c0_14 = arith.constant 0 : index
    %c0_15 = arith.constant 0 : index
    %28 = vector.load %arg4[%c0_13, %c0_14, %c0_15] : memref<2x4x256xf32, #tpu.memory_space<vmem>>, vector<2x4x256xf32>
    tpu.vector_store %arg4[%c0_13, %c0_14, %c0_15], %27 {strides = array<i32>} : memref<2x4x256xf32, #tpu.memory_space<vmem>>, vector<2x4x256xf32>,
    return
  }
  func.func @transform_0(%arg0: i32) -> (i32, i32, i32) {
    %c0_i32 = arith.constant 0 : i32
    %c0_i32_0 = arith.constant 0 : i32
    %c0_i32_1 = arith.constant 0 : i32
    return %c0_i32, %arg0, %c0_i32_0 : i32, i32, i32
  }
  func.func @transform_1(%arg0: i32) -> (i32, i32, i32) {
    %c0_i32 = arith.constant 0 : i32
    %c0_i32_0 = arith.constant 0 : i32
    %c0_i32_1 = arith.constant 0 : i32
    return %c0_i32, %arg0, %c0_i32_0 : i32, i32, i32
  }
  func.func @transform_2(%arg0: i32) -> (i32, i32, i32) {
    %c0_i32 = arith.constant 0 : i32
    %c0_i32_0 = arith.constant 0 : i32
    %c0_i32_1 = arith.constant 0 : i32
    return %c0_i32, %arg0, %c0_i32_0 : i32, i32, i32
  }
  func.func @transform_3(%arg0: i32) -> (i32, i32, i32) {
    %c0_i32 = arith.constant 0 : i32
    %c0_i32_0 = arith.constant 0 : i32
    %c0_i32_1 = arith.constant 0 : i32
    return %c0_i32, %arg0, %c0_i32_0 : i32, i32, i32
  }
}

</mosaic_0001>

<llo_original>
// kernel: tpu_custom_call.1
$region0: #{tpu_custom_call.1}
  #allocation0 [shape = 'u32[]', space=smem, size = 0x4, offset = 0x4, fixed_abs, tag = 'smem constant byte address 0x4 - core index']
  #allocation1 [shape = 'u32[144,128]{1,0:T(1,128)}', space=vmem, size = 0x12000, scoped, tag = 'internal scratch']
  %s0 = inlined_call_operand.vmem [shape: f32[2,4,256], index: 0, kind: input, shape index: {}]
  %s1 = inlined_call_operand.vmem [shape: f32[2,4,1], index: 1, kind: input, shape index: {}]
  %s2 = inlined_call_operand.vmem [shape: f32[2,4,1], index: 2, kind: input, shape index: {}]
  %s3 = inlined_call_operand.hbm [shape: f32[2,4,256], index: 3, kind: output, shape index: {}]
  %s4 = sld [smem:[#allocation0]]
  $region22: #{tpu_custom_call.1} parent=0
    _
  %s6 = ssub.s32 1, %s4
  %s7 = scalar_select 0, %s6, %s4
  $region1: #{tpu_custom_call.1} parent=0
    #allocation2 [shape = 'u8[8192]{0}', space=vmem, size = 0x2000, scoped, tag = 'output window, operand 0, single buffered']
    #allocation3 [shape = 's32[1]{0}', space=sflag, size = 0x4, scoped, tag = 'scoped memory for tpu_custom_call.1']
    %8 = vsyncpa [#allocation3], 0
    // Predicated region
    $region2: #{tpu_custom_call.1} parent=1 // pred_check
      _
    $region3: #{tpu_custom_call.1} parent=1 // pred_check_branch
      %10 = sbr.rel (0) target = $region5
    $region4: #{tpu_custom_call.1} parent=1 // pred_region
      _
    $region5: #{tpu_custom_call.1} parent=1 // pred_fallthru
      _
    // Predicated region
    $region6: #{tpu_custom_call.1} parent=1 // pred_check
      _
    $region7: #{tpu_custom_call.1} parent=1 // pred_check_branch
      %12 = sbr.rel (0) target = $region9
    $region8: #{tpu_custom_call.1} parent=1 // pred_region
      _
    $region9: #{tpu_custom_call.1} parent=1 // pred_fallthru
      _
    // Predicated region
    $region10: #{tpu_custom_call.1} parent=1 // pred_check
      _
    $region11: #{tpu_custom_call.1} parent=1 // pred_check_branch
      %14 = sbr.rel (0) target = $region13
    $region12: #{tpu_custom_call.1} parent=1 // pred_region
      _
    $region13: #{tpu_custom_call.1} parent=1 // pred_fallthru
      _
    %v15 = vld [vmem:[%s0] sm:$0xff]
    %v16 = vld [vmem:[%s0 + $0x8] sm:$0xff]
    %v19 = vcombine.high %v15, %v15
    %v20 = vcombine.high %v16, %v16
    %vm23 = vcmask 1043456
    %v24 = vsel %vm23, %v15, 0.0
    %v25 = vsel %vm23, %v19, 0.0
    %v26 = vadd.f32 %v24, %v25
    %v27 = vsel %vm23, %v16, 0.0
    %v28 = vadd.f32 %v26, %v27
    %v29 = vsel %vm23, %v20, 0.0
    %v30 = vadd.f32 %v28, %v29
    %31 = vadd.xlane.f32.xlu0 %v30
    %v32 = vpop.xlane.xlu0 %31
    %v33 = vmul.f32 %v32, 0.001953125
    %v34 = vmul.f32 %v15, %v15
    %v35 = vmul.f32 %v16, %v16
    %v38 = vcombine.high %v34, %v34
    %v39 = vcombine.high %v35, %v35
    %v42 = vsel %vm23, %v34, 0.0
    %v43 = vsel %vm23, %v38, 0.0
    %v44 = vadd.f32 %v42, %v43
    %v45 = vsel %vm23, %v35, 0.0
    %v46 = vadd.f32 %v44, %v45
    %v47 = vsel %vm23, %v39, 0.0
    %v48 = vadd.f32 %v46, %v47
    %49 = vadd.xlane.f32.xlu0 %v48
    %v50 = vpop.xlane.xlu0 %49
    %v51 = vmul.f32 %v50, 0.001953125
    %v52 = vmul.f32 %v33, %v33
    %v53 = vsub.f32 %v51, %v52
    %v54 = vmax.f32 %v53, 0.0
    %v55 = vadd.f32 %v54, 1e-05
    %v56 = vrsqrt.pop %v55
    %v57 = vld [vmem:[%s1] sm:$0xf]
    %v58 = vld [vmem:[%s1 + $0x4] sm:$0xf]
    %v59 = vmul.f32 %v57, %v56
    %v60 = vmul.f32 %v58, %v56
    %v61 = vld [vmem:[%s2] sm:$0xf]
    %v62 = vld [vmem:[%s2 + $0x4] sm:$0xf]
    %v63 = vmul.f32 %v59, %v33
    %v64 = vmul.f32 %v60, %v33
    %v65 = vsub.f32 %v61, %v63
    %v66 = vsub.f32 %v62, %v64
    %68 = vset.pattern.permute.xlu0 0
    %69 = vperm.xlu0 %68, %v59
    %v70 = vpop.permute.xlu0 %69
    %72 = vset.pattern.permute.xlu0 0
    %73 = vperm.xlu0 %72, %v60
    %v74 = vpop.permute.xlu0 %73
    %v76 = vunpack.c.l.s4 839922192
    %v77 = vunpack.c.0.s8 %v76
    %v78 = vlaneseq
    %v79 = vshrl.u32 %v78, 7
    %v80 = vsub.s32 %v77, %v79
    %v81 = vrot.slane %v70, %v80
    %v83 = vunpack.c.l.s4 839922192
    %v84 = vunpack.c.0.s8 %v83
    %v85 = vlaneseq
    %v86 = vshrl.u32 %v85, 7
    %v87 = vsub.s32 %v84, %v86
    %v88 = vrot.slane %v74, %v87
    %v91 = vmul.f32 %v15, %v81
    %v92 = vmul.f32 %v16, %v88
    %94 = vset.pattern.permute.xlu0 0
    %95 = vperm.xlu0 %94, %v65
    %v96 = vpop.permute.xlu0 %95
    %98 = vset.pattern.permute.xlu0 0
    %99 = vperm.xlu0 %98, %v66
    %v100 = vpop.permute.xlu0 %99
    %v102 = vunpack.c.l.s4 839922192
    %v103 = vunpack.c.0.s8 %v102
    %v104 = vlaneseq
    %v105 = vshrl.u32 %v104, 7
    %v106 = vsub.s32 %v103, %v105
    %v107 = vrot.slane %v96, %v106
    %v109 = vunpack.c.l.s4 839922192
    %v110 = vunpack.c.0.s8 %v109
    %v111 = vlaneseq
    %v112 = vshrl.u32 %v111, 7
    %v113 = vsub.s32 %v110, %v112
    %v114 = vrot.slane %v100, %v113
    %v117 = vadd.f32 %v91, %v107
    %v118 = vadd.f32 %v92, %v114
    %119 = vst [vmem:[#allocation2] sm:$0xff] %v117
    %120 = vst [vmem:[#allocation2 + $0x8] sm:$0xff] %v118
    // Predicated region
    $region14: #{tpu_custom_call.1} parent=1 // pred_check
      _
    $region15: #{tpu_custom_call.1} parent=1 // pred_check_branch
      %122 = sbr.rel (0) target = $region17
    $region16: #{tpu_custom_call.1} parent=1 // pred_region
      %s124 = ssub.s32 256, 256
      %125 = vsyncadd [#allocation3], %s124
      %s126 = sshll.u32 [#allocation2], 4
      %s127 = int_to_ptr.vmem [resolvable:$true] %s126
      %132 = dma.vmem_to_hbm [thread:$0]  %s127, 256, %s3, [#allocation3], 128, 128, 8
    $region17: #{tpu_custom_call.1} parent=1 // pred_fallthru
      _
    // Predicated region
    $region18: #{tpu_custom_call.1} parent=1 // pred_check
      _
    $region19: #{tpu_custom_call.1} parent=1 // pred_check_branch
      %134 = sbr.rel (0) target = $region21
    $region20: #{tpu_custom_call.1} parent=1 // pred_region
      %135 = dma.done [#allocation3], 256
    $region21: #{tpu_custom_call.1} parent=1 // pred_fallthru
      _
    %136 = vsyncpa [#allocation3], 1

</llo_original>
